<compile_context>
chip_gen: v5e
topology: v5e:2x2
jax: 0.10.0
libtpu: 0.0.40
codegen_flags: <defaults>
</compile_context>

<pallas_src>
import jax
import jax.numpy as jnp
from jax.experimental import pallas as pl
from jax.experimental.pallas import tpu as pltpu


def _round_up(x, m):
    return (x + m - 1) // m * m


def _vmem_capacity_bytes():
    try:
        return int(pltpu.get_tpu_info().vmem_capacity_bytes)
    except Exception:
        return 64 * 1024 * 1024  # v7x per-TC value: smallest across v5e/v6e/v7x


_VMEM_CAP = _vmem_capacity_bytes()
_VMEM_LIMIT = max(32 * 1024 * 1024,
                  min(_VMEM_CAP - 16 * 1024 * 1024, 100 * 1024 * 1024))
_VMEM_BUDGET = int(_VMEM_LIMIT * 0.85)


# ---------------------------------------------------------------------------
# Tile planning
# ---------------------------------------------------------------------------
def _select_tile(n, max_tile):
    """Return (tile, padded_n).

    tile == n (single full block, zero padding, allowed even if unaligned)
    when n <= max_tile; otherwise the power-of-two multiple of 128 <= max_tile
    minimizing padded_n (tie-break: larger tile => fewer grid steps)."""
    if n <= max_tile:
        return n, n
    best_t, best_pad = 128, _round_up(n, 128)
    t = 256
    while t <= max_tile:
        pad = _round_up(n, t)
        if pad <= best_pad:
            best_t, best_pad = t, pad
        t *= 2
    return best_t, best_pad


def _plan_tiles(n, feat_pad, out_pad, budget):
    """Choose (tm, n_rows, tk, n_cols, pad_a) for the aggregation kernel so the
    double-buffered working set fits `budget` bytes of scoped VMEM."""
    max_tm, max_tk = 1024, 2048
    # v7x has 2 TensorCores -> keep >= 2 row tiles when there is enough work.
    if n >= 1024:
        max_tm = min(max_tm, max(128, (_round_up(n, 128) // 2) // 128 * 128))
    while True:
        tm, n_rows = _select_tile(n, max_tm)
        tk, n_cols = _select_tile(n, max_tk)
        pad_a = (n_rows != n) or (n_cols != n)
        a_bytes = 2 if pad_a else 4          # padded copy is bf16; raw A stays f32
        est = (2 * tm * tk * a_bytes         # A tile, double buffered
               + 2 * tk * feat_pad * 2       # X / H tile (bf16), double buffered
               + 2 * feat_pad * out_pad * 4  # resident W (counted double buffered)
               + 2 * tm * out_pad * 4        # output tile (f32), double buffered
               + tm * feat_pad * 4           # f32 accumulator scratch
               + 2 * out_pad * 4)            # bias
        if est <= budget or (max_tm <= 128 and max_tk <= 256):
            return tm, n_rows, tk, n_cols, pad_a
        if max_tk > 256:
            max_tk //= 2
        elif max_tm > 128:
            max_tm //= 2


# ---------------------------------------------------------------------------
# Kernels
# ---------------------------------------------------------------------------
def _agg_project_kernel(a_ref, x_ref, w_ref, b_ref, o_ref, acc_ref):
    """o = (sum_k A[i,k] @ X[k]) @ W^T + b  (aggregate; project in the finalize)."""
    k = pl.program_id(1)

    @pl.when(k == 0)
    def _init():
        acc_ref[...] = jnp.zeros_like(acc_ref)

    # On-chip cast of the A tile -> bf16 MXU matmul with f32 accumulation.
    acc_ref[...] += jnp.dot(a_ref[...].astype(jnp.bfloat16), x_ref[...],
                            preferred_element_type=jnp.float32)

    @pl.when(k == pl.num_programs(1) - 1)
    def _finalize():
        # W is pre-transposed to (in_pad, out_pad); keep the projection in f32
        # (small, once per row tile) -> no extra rounding of the accumulator.
        o_ref[...] = (jnp.dot(acc_ref[...], w_ref[...],
                              preferred_element_type=jnp.float32)
                      + b_ref[...]).astype(o_ref.dtype)


def _agg_bias_kernel(a_ref, h_ref, b_ref, o_ref, acc_ref):
    """o = (sum_k A[i,k] @ H[k]) + b  (features already projected)."""
    k = pl.program_id(1)

    @pl.when(k == 0)
    def _init():
        acc_ref[...] = jnp.zeros_like(acc_ref)

    acc_ref[...] += jnp.dot(a_ref[...].astype(jnp.bfloat16), h_ref[...],
                            preferred_element_type=jnp.float32)

    @pl.when(k == pl.num_programs(1) - 1)
    def _finalize():
        o_ref[...] = (acc_ref[...] + b_ref[...]).astype(o_ref.dtype)


def _proj_kernel(x_ref, w_ref, o_ref):
    """H = X @ W^T  (f32 matmul; bf16 output for the bandwidth-bound aggregation)."""
    o_ref[...] = jnp.dot(x_ref[...], w_ref[...],
                         preferred_element_type=jnp.float32).astype(o_ref.dtype)


# ---------------------------------------------------------------------------
# Wrapper
# ---------------------------------------------------------------------------
@jax.jit
def gcn_layer(a_hat, x, weight, bias):
    """Pallas GCNLayer.forward(A_hat, X) -> (N, out_dim) f32.

    a_hat : (N, N) f32 (or bf16), x : (N, in_dim) f32,
    weight: (out_dim, in_dim) f32, bias : (out_dim,) f32.
    """
    n, in_dim = x.shape
    out_dim = weight.shape[0]

    in_pad = _round_up(in_dim, 128)
    out_pad = _round_up(out_dim, 128)
    pre_project = out_pad < in_pad            # contract to the narrower width first
    feat_pad = out_pad if pre_project else in_pad

    tm, n_rows, tk, n_cols, pad_a = _plan_tiles(n, feat_pad, out_pad, _VMEM_BUDGET)

    # A_hat: no host copy unless padding to whole tiles is unavoidable; the
    # bf16 cast happens per-tile inside the kernel.  The padded copy (rare,
    # awkward large N only) is written once in bf16.
    if pad_a:
        a_in = jnp.zeros((n_rows, n_cols), jnp.bfloat16).at[:n, :n].set(
            a_hat.astype(jnp.bfloat16))
    else:
        a_in = a_hat

    # Small operands: pad host-side (lane-dense blocks / stores); W is
    # pre-transposed once and kept f32.
    w_t = jnp.zeros((in_pad, out_pad), jnp.float32).at[:in_dim, :out_dim].set(
        weight.astype(jnp.float32).T)
    b_p = jnp.zeros((1, out_pad), jnp.float32).at[0, :out_dim].set(
        bias.astype(jnp.float32))

    grid = (n_rows // tm, n_cols // tk)
    a_spec = pl.BlockSpec((tm, tk), lambda i, k: (i, k))
    b_spec = pl.BlockSpec((1, out_pad), lambda i, k: (0, 0))
    out_spec = pl.BlockSpec((tm, out_pad), lambda i, k: (i, 0))
    cparams = pltpu.CompilerParams(
        dimension_semantics=("parallel", "arbitrary"),
        vmem_limit_bytes=_VMEM_LIMIT)

    if pre_project:
        # H = X @ W^T first (O(N*in*out)) so the O(N^2) aggregation moves the
        # narrower out_pad width; padded rows of X are zero -> H tail rows are 0.
        x_p = jnp.zeros((n_cols, in_pad), jnp.float32).at[:n, :in_dim].set(
            x.astype(jnp.float32))
        tp = n_cols if (n_cols == n and tk == n) else min(tk, 512)
        h = pl.pallas_call(
            _proj_kernel,
            out_shape=jax.ShapeDtypeStruct((n_cols, out_pad), jnp.bfloat16),
            grid_spec=pltpu.PrefetchScalarGridSpec(
                num_scalar_prefetch=0, grid=(n_cols // tp,),
                in_specs=[pl.BlockSpec((tp, in_pad), lambda i: (i, 0)),
                          pl.BlockSpec((in_pad, out_pad), lambda i: (0, 0))],
                out_specs=pl.BlockSpec((tp, out_pad), lambda i: (i, 0))),
            compiler_params=pltpu.CompilerParams(
                dimension_semantics=("parallel",),
                vmem_limit_bytes=_VMEM_LIMIT),
        )(x_p, w_t)

        out_p = pl.pallas_call(
            _agg_bias_kernel,
            out_shape=jax.ShapeDtypeStruct((n_rows, out_pad), jnp.float32),
            grid_spec=pltpu.PrefetchScalarGridSpec(
                num_scalar_prefetch=0, grid=grid,
                in_specs=[a_spec,
                          pl.BlockSpec((tk, out_pad), lambda i, k: (k, 0)),
                          b_spec],
                out_specs=out_spec,
                scratch_shapes=[pltpu.VMEM((tm, out_pad), jnp.float32)]),
            compiler_params=cparams,
        )(a_in, h, b_p)
    else:
        x_p = jnp.zeros((n_cols, in_pad), jnp.bfloat16).at[:n, :in_dim].set(
            x.astype(jnp.bfloat16))
        out_p = pl.pallas_call(
            _agg_project_kernel,
            out_shape=jax.ShapeDtypeStruct((n_rows, out_pad), jnp.float32),
            grid_spec=pltpu.PrefetchScalarGridSpec(
                num_scalar_prefetch=0, grid=grid,
                in_specs=[a_spec,
                          pl.BlockSpec((tk, in_pad), lambda i, k: (k, 0)),
                          pl.BlockSpec((in_pad, out_pad), lambda i, k: (0, 0)),
                          b_spec],
                out_specs=out_spec,
                scratch_shapes=[pltpu.VMEM((tm, in_pad), jnp.float32)]),
            compiler_params=cparams,
        )(a_in, x_p, w_t, b_p)

    if n_rows == n and out_pad == out_dim:
        return out_p
    return out_p[:n, :out_dim]


# ---------------------------------------------------------------------------
# Demo / correctness check
# ---------------------------------------------------------------------------
def _make_inputs(key, n, in_dim, out_dim):
    k_a, k_x, k_w, k_b = jax.random.split(key, 4)
    # Symmetric, row-normalized adjacency with self-loops.
    a_raw = jax.random.uniform(k_a, (n, n), dtype=jnp.float32)
    a_sym = 0.5 * (a_raw + a_raw.T) + jnp.eye(n, dtype=jnp.float32)
    a_hat = a_sym / jnp.sum(a_sym, axis=1, keepdims=True)
    x = jax.random.normal(k_x, (n, in_dim), dtype=jnp.float32)
    bound = 1.0 / jnp.sqrt(jnp.float32(in_dim))
    weight = jax.random.uniform(k_w, (out_dim, in_dim), dtype=jnp.float32,
                                minval=-bound, maxval=bound)
    bias = jax.random.uniform(k_b, (out_dim,), dtype=jnp.float32,
                              minval=-bound, maxval=bound)
    return a_hat, x, weight, bias


if __name__ == "__main__":
    key = jax.random.PRNGKey(0)
    k1, k2 = jax.random.split(key)

    # Config 1: out_dim >= in_dim -> fused aggregate-then-project path.
    # Config 2: out_dim <  in_dim -> pre-projection (project-first) path.
    configs = [(k1, 16, 32, 64), (k2, 48, 256, 64)]

    ok = True
    for cfg_key, n, in_dim, out_dim in configs:
        a_hat, x, weight, bias = _make_inputs(cfg_key, n, in_dim, out_dim)
        out = jax.block_until_ready(gcn_layer(a_hat, x, weight, bias))

        ref = (a_hat @ x) @ weight.T + bias       # plain-JAX f32 reference
        ok &= out.shape == (n, out_dim)
        # bf16 A/X operands with f32 accumulation and f32 W projection.
        ok &= bool(jnp.allclose(out, ref, atol=2e-2, rtol=2e-2))

    assert ok
    print("KERNEL_OK")
</pallas_src>

<mosaic_0001>
module attributes {stable_mosaic.version = 11 : i64} {
  func.func @_agg_project_kernel(%arg0: i32, %arg1: i32, %arg2: memref<16x16xf32, #tpu.memory_space<vmem>>, %arg3: memref<16x128xbf16, #tpu.memory_space<vmem>>, %arg4: memref<128x128xf32, #tpu.memory_space<vmem>>, %arg5: memref<1x128xf32, #tpu.memory_space<vmem>>, %arg6: memref<16x128xf32, #tpu.memory_space<vmem>>, %arg7: memref<16x128xf32, #tpu.memory_space<vmem>>) attributes {dimension_semantics = [#tpu.dimension_semantics<parallel>, #tpu.dimension_semantics<arbitrary>], iteration_bounds = array<i64: 1, 1>, scalar_prefetch = 0 : i64, scratch_operands = 1 : i64, tpu.core_type = #tpu.core_type<tc>, window_params = [{transform_indices = @transform_0, window_bounds = array<i64: 16, 16>}, {transform_indices = @transform_1, window_bounds = array<i64: 16, 128>}, {pipeline_mode = #tpu.pipeline_mode<synchronous>, transform_indices = @transform_2, window_bounds = array<i64: 128, 128>}, {pipeline_mode = #tpu.pipeline_mode<synchronous>, transform_indices = @transform_3, window_bounds = array<i64: 1, 128>}, {transform_indices = @transform_4, window_bounds = array<i64: 16, 128>}]} {
    %c0_i32 = arith.constant 0 : i32
    %0 = arith.cmpi eq, %arg1, %c0_i32 : i32
    %1 = arith.extui %0 : i1 to i32
    %c0_i32_0 = arith.constant 0 : i32
    %2 = arith.cmpi ne, %1, %c0_i32_0 : i32
    scf.if %2 {
      %cst_10 = arith.constant 0.000000e+00 : f32
      %13 = vector.broadcast %cst_10 : f32 to vector<16x128xf32>
      %c0_11 = arith.constant 0 : index
      %c0_12 = arith.constant 0 : index
      %14 = vector.load %arg7[%c0_11, %c0_12] : memref<16x128xf32, #tpu.memory_space<vmem>>, vector<16x128xf32>
      tpu.vector_store %arg7[%c0_11, %c0_12], %13 {strides = array<i32>} : memref<16x128xf32, #tpu.memory_space<vmem>>, vector<16x128xf32>,
    } else {
    }
    %c0 = arith.constant 0 : index
    %c0_1 = arith.constant 0 : index
    %3 = vector.load %arg7[%c0, %c0_1] : memref<16x128xf32, #tpu.memory_space<vmem>>, vector<16x128xf32>
    %c0_2 = arith.constant 0 : index
    %c0_3 = arith.constant 0 : index
    %4 = vector.load %arg2[%c0_2, %c0_3] : memref<16x16xf32, #tpu.memory_space<vmem>>, vector<16x16xf32>
    %5 = arith.truncf %4 : vector<16x16xf32> to vector<16x16xbf16>
    %c0_4 = arith.constant 0 : index
    %c0_5 = arith.constant 0 : index
    %6 = vector.load %arg3[%c0_4, %c0_5] : memref<16x128xbf16, #tpu.memory_space<vmem>>, vector<16x128xbf16>
    %cst = arith.constant dense<0.000000e+00> : vector<16x128xf32>
    %7 = tpu.matmul %5, %6, %cst {dimension_numbers = #tpu.dot_dimension_numbers<[1], [0], [0], [1], [0, 0, 1, 1], [], []>} : vector<16x16xbf16>, vector<16x128xbf16>, vector<16x128xf32> -> vector<16x128xf32>
    %8 = arith.addf %3, %7 : vector<16x128xf32>
    %c0_6 = arith.constant 0 : index
    %c0_7 = arith.constant 0 : index
    %9 = vector.load %arg7[%c0_6, %c0_7] : memref<16x128xf32, #tpu.memory_space<vmem>>, vector<16x128xf32>
    tpu.vector_store %arg7[%c0_6, %c0_7], %8 {strides = array<i32>} : memref<16x128xf32, #tpu.memory_space<vmem>>, vector<16x128xf32>,
    %c0_i32_8 = arith.constant 0 : i32
    %10 = arith.cmpi eq, %arg1, %c0_i32_8 : i32
    %11 = arith.extui %10 : i1 to i32
    %c0_i32_9 = arith.constant 0 : i32
    %12 = arith.cmpi ne, %11, %c0_i32_9 : i32
    scf.if %12 {
      %c0_10 = arith.constant 0 : index
      %c0_11 = arith.constant 0 : index
      %13 = vector.load %arg7[%c0_10, %c0_11] : memref<16x128xf32, #tpu.memory_space<vmem>>, vector<16x128xf32>
      %c0_12 = arith.constant 0 : index
      %c0_13 = arith.constant 0 : index
      %14 = vector.load %arg4[%c0_12, %c0_13] : memref<128x128xf32, #tpu.memory_space<vmem>>, vector<128x128xf32>
      %cst_14 = arith.constant dense<0.000000e+00> : vector<16x128xf32>
      %15 = tpu.matmul %13, %14, %cst_14 {dimension_numbers = #tpu.dot_dimension_numbers<[1], [0], [0], [1], [0, 0, 1, 1], [], []>} : vector<16x128xf32>, vector<128x128xf32>, vector<16x128xf32> -> vector<16x128xf32>
      %c0_15 = arith.constant 0 : index
      %c0_16 = arith.constant 0 : index
      %16 = vector.load %arg5[%c0_15, %c0_16] : memref<1x128xf32, #tpu.memory_space<vmem>>, vector<1x128xf32>
      %17 = vector.broadcast %16 : vector<1x128xf32> to vector<16x128xf32>
      %18 = arith.addf %15, %17 : vector<16x128xf32>
      %c0_17 = arith.constant 0 : index
      %c0_18 = arith.constant 0 : index
      %19 = vector.load %arg6[%c0_17, %c0_18] : memref<16x128xf32, #tpu.memory_space<vmem>>, vector<16x128xf32>
      tpu.vector_store %arg6[%c0_17, %c0_18], %18 {strides = array<i32>} : memref<16x128xf32, #tpu.memory_space<vmem>>, vector<16x128xf32>,
    } else {
    }
    return
  }
  func.func @transform_0(%arg0: i32, %arg1: i32) -> (i32, i32) {
    %c0_i32 = arith.constant 0 : i32
    return %arg0, %arg1 : i32, i32
  }
  func.func @transform_1(%arg0: i32, %arg1: i32) -> (i32, i32) {
    %c0_i32 = arith.constant 0 : i32
    %c0_i32_0 = arith.constant 0 : i32
    return %arg1, %c0_i32 : i32, i32
  }
  func.func @transform_2(%arg0: i32, %arg1: i32) -> (i32, i32) {
    %c0_i32 = arith.constant 0 : i32
    %c0_i32_0 = arith.constant 0 : i32
    %c0_i32_1 = arith.constant 0 : i32
    return %c0_i32, %c0_i32_0 : i32, i32
  }
  func.func @transform_3(%arg0: i32, %arg1: i32) -> (i32, i32) {
    %c0_i32 = arith.constant 0 : i32
    %c0_i32_0 = arith.constant 0 : i32
    %c0_i32_1 = arith.constant 0 : i32
    return %c0_i32, %c0_i32_0 : i32, i32
  }
  func.func @transform_4(%arg0: i32, %arg1: i32) -> (i32, i32) {
    %c0_i32 = arith.constant 0 : i32
    %c0_i32_0 = arith.constant 0 : i32
    return %arg0, %c0_i32 : i32, i32
  }
}

</mosaic_0001>

<llo_original>
// kernel: gcn_layer.1
$region0: #{gcn_layer.1}
  #allocation0 [shape = 'u32[]', space=smem, size = 0x4, offset = 0x4, fixed_abs, tag = 'smem constant byte address 0x4 - core index']
  #allocation1 [shape = 'u32[72,128]{1,0:T(1,128)}', space=vmem, size = 0x9000, scoped, tag = 'internal scratch']
  #allocation2 [shape = 'f32[16,128]{1,0:T(8,128)}', space=vmem, size = 0x2000, scoped, tag = 'scratch operand']
  %s0 = inlined_call_operand.vmem [shape: f32[16,16], index: 0, kind: input, shape index: {}]
  %s1 = inlined_call_operand.vmem [shape: bf16[16,128], index: 1, kind: input, shape index: {}]
  %s2 = inlined_call_operand.vmem [shape: f32[128,128], index: 2, kind: input, shape index: {}]
  %s3 = inlined_call_operand.vmem [shape: f32[1,128], index: 3, kind: input, shape index: {}]
  %s4 = inlined_call_operand.hbm [shape: f32[16,128], index: 4, kind: output, shape index: {}]
  %s5 = sld [smem:[#allocation0]]
  $region34: #{gcn_layer.1} parent=0
    _
  %s7 = ssub.s32 1, %s5
  %s8 = scalar_select 0, %s7, %s5
  $region1: #{gcn_layer.1} parent=0
    #allocation3 [shape = 'u8[8192]{0}', space=vmem, size = 0x2000, scoped, tag = 'output window, operand 0, single buffered']
    #allocation4 [shape = 's32[1]{0}', space=sflag, size = 0x4, scoped, tag = 'scoped memory for gcn_layer.1']
    %9 = vsyncpa [#allocation4], 0
    // Predicated region
    $region2: #{gcn_layer.1} parent=1 // pred_check
      _
    $region3: #{gcn_layer.1} parent=1 // pred_check_branch
      %11 = sbr.rel (0) target = $region5
    $region4: #{gcn_layer.1} parent=1 // pred_region
      _
    $region5: #{gcn_layer.1} parent=1 // pred_fallthru
      _
    // Predicated region
    $region6: #{gcn_layer.1} parent=1 // pred_check
      _
    $region7: #{gcn_layer.1} parent=1 // pred_check_branch
      %13 = sbr.rel (0) target = $region9
    $region8: #{gcn_layer.1} parent=1 // pred_region
      _
    $region9: #{gcn_layer.1} parent=1 // pred_fallthru
      _
    // Predicated region
    $region10: #{gcn_layer.1} parent=1 // pred_check
      _
    $region11: #{gcn_layer.1} parent=1 // pred_check_branch
      %15 = sbr.rel (0) target = $region13
    $region12: #{gcn_layer.1} parent=1 // pred_region
      _
    $region13: #{gcn_layer.1} parent=1 // pred_fallthru
      _
    // Predicated region
    $region14: #{gcn_layer.1} parent=1 // pred_check
      _
    $region15: #{gcn_layer.1} parent=1 // pred_check_branch
      %17 = sbr.rel (0) target = $region17
    $region16: #{gcn_layer.1} parent=1 // pred_region
      _
    $region17: #{gcn_layer.1} parent=1 // pred_fallthru
      _
    %p19 = scmp.eq.s32.totalorder 0, 0
    // Predicated region
    $region18: #{gcn_layer.1} parent=1 // pred_check
      %p20 = pneg %p19
    $region19: #{gcn_layer.1} parent=1 // pred_check_branch
      %22 = sbr.rel (%p20) target = $region21
    $region20: #{gcn_layer.1} parent=1 // pred_region
      %23 = vst [vmem:[#allocation2] sm:$0xff] 0.0
      %24 = vst [vmem:[#allocation2 + $0x8] sm:$0xff] 0.0
    $region21: #{gcn_layer.1} parent=1 // pred_fallthru
      _
    %v25 = vld [vmem:[#allocation2] sm:$0xff]
    %v26 = vld [vmem:[#allocation2 + $0x8] sm:$0xff]
    %v27 = vld [vmem:[%s0] sm:$0xff]
    %v28 = vld [vmem:[%s0 + $0x8] sm:$0xff]
    %v29 = vpack.c.bf16 %v28, %v27
    %v30 = vld [vmem:[%s1] sm:$0xf]
    %v31 = vld [vmem:[%s1 + $0x4] sm:$0xf]
    %v34 = vunpack.c.l.b16 %v30
    %v35 = vunpack.c.l.b16 %v31
    %v36 = vpack.c.b16 %v35, %v34
    %vm38 = vcmask 130048
    %v40 = vsel %vm38, %v29, 0
    %42 = vmatpush.bf16.msra.mxu0 0
    %43 = vmatpush.bf16.msra.mxu0 0
    %44 = vmatpush.bf16.msra.mxu0 0
    %45 = vmatpush.bf16.msra.mxu0 0
    %46 = vmatpush.bf16.msra.mxu0 0
    %47 = vmatpush.bf16.msra.mxu0 0
    %48 = vmatpush.bf16.msra.mxu0 0
    %49 = vmatpush.bf16.msra.mxu0 %v36
    %50 = vmatmul.bf16.gmra.mxu0 %v40
    %v51 = vpop.f32.mrf.mxu0
    %v52 = vadd.f32 0.0, %v51
    %v53 = vpop.f32.mrf.mxu0
    %v54 = vadd.f32 0.0, %v53
    %55 = vdwg.mxu0
    %v56 = vadd.f32 %v25, %v52
    %v57 = vadd.f32 %v26, %v54
    %58 = vst [vmem:[#allocation2] sm:$0xff] %v56
    %59 = vst [vmem:[#allocation2 + $0x8] sm:$0xff] %v57
    // Predicated region
    $region22: #{gcn_layer.1} parent=1 // pred_check
      %p60 = pneg %p19
    $region23: #{gcn_layer.1} parent=1 // pred_check_branch
      %62 = sbr.rel (%p60) target = $region25
    $region24: #{gcn_layer.1} parent=1 // pred_region
      %v63 = vld [vmem:[#allocation2] sm:$0xff]
      %v64 = vld [vmem:[#allocation2 + $0x8] sm:$0xff]
      %v65 = vld [vmem:[%s2] sm:$0xff]
      %v66 = vld [vmem:[%s2 + $0x8] sm:$0xff]
      %v67 = vld [vmem:[%s2 + $0x10] sm:$0xff]
      %v68 = vld [vmem:[%s2 + $0x18] sm:$0xff]
      %v69 = vld [vmem:[%s2 + $0x20] sm:$0xff]
      %v70 = vld [vmem:[%s2 + $0x28] sm:$0xff]
      %v71 = vld [vmem:[%s2 + $0x30] sm:$0xff]
      %v72 = vld [vmem:[%s2 + $0x38] sm:$0xff]
      %v73 = vld [vmem:[%s2 + $0x40] sm:$0xff]
      %v74 = vld [vmem:[%s2 + $0x48] sm:$0xff]
      %v75 = vld [vmem:[%s2 + $0x50] sm:$0xff]
      %v76 = vld [vmem:[%s2 + $0x58] sm:$0xff]
      %v77 = vld [vmem:[%s2 + $0x60] sm:$0xff]
      %v78 = vld [vmem:[%s2 + $0x68] sm:$0xff]
      %v79 = vld [vmem:[%s2 + $0x70] sm:$0xff]
      %v80 = vld [vmem:[%s2 + $0x78] sm:$0xff]
      %v81 = vld [vmem:[%s3] sm:$0x1]
      %v83 = vperm.slane %v81, 0
      %85 = vmatpush.msra.mxu0 %v80
      %86 = vmatpush.msra.mxu0 %v79
      %87 = vmatpush.msra.mxu0 %v78
      %88 = vmatpush.msra.mxu0 %v77
      %89 = vmatpush.msra.mxu0 %v76
      %90 = vmatpush.msra.mxu0 %v75
      %91 = vmatpush.msra.mxu0 %v74
      %92 = vmatpush.msra.mxu0 %v73
      %93 = vmatpush.msra.mxu0 %v72
      %94 = vmatpush.msra.mxu0 %v71
      %95 = vmatpush.msra.mxu0 %v70
      %96 = vmatpush.msra.mxu0 %v69
      %97 = vmatpush.msra.mxu0 %v68
      %98 = vmatpush.msra.mxu0 %v67
      %99 = vmatpush.msra.mxu0 %v66
      %100 = vmatpush.msra.mxu0 %v65
      %101 = vmatmul.f32.gmra.mxu0 %v63
      %v102 = vpop.f32.mrf.mxu0
      %v103 = vadd.f32 %v83, %v102
      %104 = vmatmul.f32.gmra.mxu0 %v64
      %v105 = vpop.f32.mrf.mxu0
      %v106 = vadd.f32 %v83, %v105
      %107 = vdwg.mxu0
      %108 = vst [vmem:[#allocation3] sm:$0xff] %v103
      %109 = vst [vmem:[#allocation3 + $0x8] sm:$0xff] %v106
    $region25: #{gcn_layer.1} parent=1 // pred_fallthru
      _
    // Predicated region
    $region26: #{gcn_layer.1} parent=1 // pred_check
      _
    $region27: #{gcn_layer.1} parent=1 // pred_check_branch
      %111 = sbr.rel (0) target = $region29
    $region28: #{gcn_layer.1} parent=1 // pred_region
      %113 = vsyncadd [#allocation4], 0
      %s114 = sshll.u32 [#allocation3], 4
      %s115 = int_to_ptr.vmem [resolvable:$true] %s114
      %s116 = sshll.u32 %s4, 4
      %s117 = int_to_ptr.hbm [resolvable:$true] %s116
      %122 = dma.vmem_to_hbm [thread:$0]  %s115, 256, %s117, [#allocation4], 128, 128, 8
    $region29: #{gcn_layer.1} parent=1 // pred_fallthru
      _
    // Predicated region
    $region30: #{gcn_layer.1} parent=1 // pred_check
      _
    $region31: #{gcn_layer.1} parent=1 // pred_check_branch
      %124 = sbr.rel (0) target = $region33
    $region32: #{gcn_layer.1} parent=1 // pred_region
      %126 = dma.done [#allocation4], 256
    $region33: #{gcn_layer.1} parent=1 // pred_fallthru
      _
    %127 = vsyncpa [#allocation4], 1

</llo_original>
